<compile_context>
chip_gen: v7x
topology: tpu7x:2x2x1
jax: 0.10.0
libtpu: 0.0.40
codegen_flags: <defaults>
</compile_context>

<pallas_src>
import functools

import jax
import jax.numpy as jnp
import numpy as np
from jax.experimental import pallas as pl
from jax.experimental.pallas import tpu as pltpu

# ---- config (matches the PyTorch module globals) ----
n_embd = 32
n_head = 2
head_size = n_embd // n_head      # 16
block_size = 16
rope_theta = 10000.0
dropout_p = 0.2                   # PyTorch training-mode dropout rate (not used in parity test)


def _fused_heads_kernel(x_ref, w_ref, cs_ref, bias_ref, seed_ref, o_ref,
                        *, B, T, H, NH, dropout_rate):
    """Fused QKV projection (all heads) + RoPE + batched causal softmax attention."""
    BT = B * T
    H2 = H // 2
    HH = NH * H2                       # width of one q/k half-block (all heads)

    x = x_ref[...]                                                     # (BT, C)
    # One wide fused matmul for Q|K|V of every head (scale folded into the Q columns).
    qkv = jnp.dot(x, w_ref[...], preferred_element_type=jnp.float32)   # (BT, 3*NH*H)

    cos = cs_ref[:, :HH]                                               # (BT, NH*H2)
    sin = cs_ref[:, HH:]                                               # (BT, NH*H2)

    # q/k arrive in split-half ([all-heads even | all-heads odd]) order via the weight perm.
    q0 = qkv[:, 0:HH]
    q1 = qkv[:, HH:2 * HH]
    k0 = qkv[:, 2 * HH:3 * HH]
    k1 = qkv[:, 3 * HH:4 * HH]
    v = qkv[:, 4 * HH:4 * HH + NH * H]                                 # (BT, NH*H)

    # RoPE rotation: pure elementwise VPU work on the two halves, all heads at once.
    q0r = q0 * cos - q1 * sin
    q1r = q0 * sin + q1 * cos
    k0r = k0 * cos - k1 * sin
    k1r = k0 * sin + k1 * cos

    bias = bias_ref[...]                                               # (BT, BT) additive mask

    if dropout_rate > 0.0:
        pltpu.prng_seed(seed_ref[0])
        keep_scale = jnp.float32(1.0 / (1.0 - dropout_rate))
        thresh = jnp.int32(int(dropout_rate * (1 << 23)))

    dn = (((1,), (1,)), ((), ()))      # contract last dims: q @ k^T without a transpose
    outs = []
    for h in range(NH):                # static, tiny head loop — all inside ONE pallas_call
        hs = slice(h * H2, (h + 1) * H2)
        qh = jnp.concatenate([q0r[:, hs], q1r[:, hs]], axis=-1)        # (BT, H)
        kh = jnp.concatenate([k0r[:, hs], k1r[:, hs]], axis=-1)        # (BT, H)

        # One batched (BT, BT) score matmul; block-diag+causal additive bias (0 / -1e30).
        s = jax.lax.dot_general(qh, kh, dn, preferred_element_type=jnp.float32) + bias
        m = jnp.max(s, axis=-1, keepdims=True)
        p = jnp.exp(s - m)
        l = jnp.sum(p, axis=-1, keepdims=True)
        wei = p / l                    # exact divide (approx reciprocal broke 2e-4 parity)

        if dropout_rate > 0.0:         # training-mode attention dropout (inverted dropout)
            bits = pltpu.bitcast(pltpu.prng_random_bits((BT, BT)), jnp.int32)
            r = jax.lax.bitwise_and(bits, jnp.int32(0x7FFFFF))
            keep = r >= thresh
            wei = jnp.where(keep, wei * keep_scale, jnp.float32(0.0))

        outs.append(jnp.dot(wei, v[:, h * H:(h + 1) * H],
                            preferred_element_type=jnp.float32))       # (BT, H)

    out = outs[0] if NH == 1 else jnp.concatenate(outs, axis=-1)       # (BT, NH*H)
    o_ref[...] = out.astype(o_ref.dtype)                               # single lane-dense store


def multi_head_forward(x, wq, wk, wv, *, dropout_rate=0.0, seed=0):
    """Fused forward of NH independent `Head` modules (pre-projection concat of MHA).

    x : (B, T, C) f32
    wq, wk, wv : (NH, C, H) f32  (PyTorch Linear weights transposed, stacked per head)
    returns (B, T, NH*H) f32  ==  torch.cat([head_h(x) for h], dim=-1)
    """
    NH, C, H = wq.shape
    B, T, _ = x.shape
    BT = B * T
    H2 = H // 2
    scale = H ** (-0.5)

    even = jnp.arange(0, H, 2)
    odd = jnp.arange(1, H, 2)

    def heads_cols(w, idx):            # (NH, C, H) -> (C, NH*len(idx)), head-major columns
        return jnp.concatenate([w[h][:, idx] for h in range(NH)], axis=1)

    # Single fused weight: [Q_even | Q_odd | K_even | K_odd | V], scale folded into Q.
    w_qkv = jnp.concatenate([
        heads_cols(wq, even) * scale,
        heads_cols(wq, odd) * scale,
        heads_cols(wk, even),
        heads_cols(wk, odd),
        jnp.concatenate([wv[h] for h in range(NH)], axis=1),
    ], axis=1).astype(jnp.float32)                                      # (C, 3*NH*H)

    # Packed RoPE table: one input, [cos | sin], (BT, NH*H).
    theta = 1.0 / (rope_theta ** (jnp.arange(0, H, 2, dtype=jnp.float32) / H))   # (H2,)
    freqs = jnp.outer(jnp.arange(T, dtype=jnp.float32), theta)                   # (T, H2)
    cos = jnp.tile(jnp.cos(freqs), (B, NH))                                      # (BT, NH*H2)
    sin = jnp.tile(jnp.sin(freqs), (B, NH))
    cs = jnp.concatenate([cos, sin], axis=1).astype(jnp.float32)                 # (BT, NH*H)

    # Additive block-diagonal + causal bias (large finite negative, not -inf).
    idx = jnp.arange(BT)
    ridx, cidx = idx[:, None], idx[None, :]
    valid = ((ridx // T) == (cidx // T)) & (ridx >= cidx)
    bias = jnp.where(valid, 0.0, -1e30).astype(jnp.float32)                      # (BT, BT)

    x2 = x.reshape(BT, C).astype(jnp.float32)
    seed_arr = jnp.array([seed], dtype=jnp.int32)

    kernel = functools.partial(_fused_heads_kernel, B=B, T=T, H=H, NH=NH,
                               dropout_rate=float(dropout_rate))
    out2 = pl.pallas_call(
        kernel,
        out_shape=jax.ShapeDtypeStruct((BT, NH * H), x.dtype),
        in_specs=[
            pl.BlockSpec(memory_space=pltpu.MemorySpace.VMEM),   # x2      (BT, C)
            pl.BlockSpec(memory_space=pltpu.MemorySpace.VMEM),   # W_qkv   (C, 3*NH*H)
            pl.BlockSpec(memory_space=pltpu.MemorySpace.VMEM),   # cos|sin (BT, NH*H)
            pl.BlockSpec(memory_space=pltpu.MemorySpace.VMEM),   # bias    (BT, BT)
            pl.BlockSpec(memory_space=pltpu.MemorySpace.SMEM),   # seed    (1,)
        ],
        out_specs=pl.BlockSpec(memory_space=pltpu.MemorySpace.VMEM),
    )(x2, w_qkv, cs, bias, seed_arr)

    return out2.reshape(B, T, NH * H)


def head_forward(x, wq, wk, wv, *, dropout_rate=0.0, seed=0):
    """Exact `Head.forward` boundary (single head): x (B,T,C), wq/wk/wv (C,H) -> (B,T,H)."""
    return multi_head_forward(x, wq[None], wk[None], wv[None],
                              dropout_rate=dropout_rate, seed=seed)


# ------------------------- pure-JAX reference (mirrors the PyTorch code) -------------------------
def _rope_ref(t, cos, sin):
    B, T, H = t.shape
    tr = t.reshape(B, T, H // 2, 2)
    t0, t1 = tr[..., 0], tr[..., 1]
    r0 = t0 * cos - t1 * sin
    r1 = t0 * sin + t1 * cos
    return jnp.stack([r0, r1], axis=-1).reshape(B, T, H)


def head_reference(x, wq, wk, wv):
    B, T, C = x.shape
    H = wq.shape[1]
    q = x @ wq
    k = x @ wk
    v = x @ wv
    theta = 1.0 / (rope_theta ** (jnp.arange(0, H, 2, dtype=jnp.float32) / H))
    freqs = jnp.outer(jnp.arange(T, dtype=jnp.float32), theta)
    cos, sin = jnp.cos(freqs), jnp.sin(freqs)
    q = _rope_ref(q, cos, sin)
    k = _rope_ref(k, cos, sin)
    s = jnp.einsum("btd,bsd->bts", q, k) * (H ** -0.5)
    mask = jnp.tril(jnp.ones((T, T), dtype=bool))
    s = jnp.where(mask[None], s, -jnp.inf)
    w = jax.nn.softmax(s, axis=-1)
    return jnp.einsum("bts,bsd->btd", w, v)


if __name__ == "__main__":
    B, T, C, H, NH = 2, block_size, n_embd, head_size, n_head   # (2, 16, 32), H=16, NH=2

    key = jax.random.PRNGKey(0)
    kx, kq, kk, kv = jax.random.split(key, 4)
    x = jax.random.normal(kx, (B, T, C), dtype=jnp.float32)
    # deterministic "init weights": normal(0, 0.02), same as GPTLanguageModel._init_weights
    wq = 0.02 * jax.random.normal(kq, (NH, C, H), dtype=jnp.float32)
    wk = 0.02 * jax.random.normal(kk, (NH, C, H), dtype=jnp.float32)
    wv = 0.02 * jax.random.normal(kv, (NH, C, H), dtype=jnp.float32)

    # Fused kernel: both Heads of the MultiHeadAttention in one pallas_call (dropout=0 parity).
    out = jax.block_until_ready(multi_head_forward(x, wq, wk, wv, dropout_rate=0.0))
    ref = jnp.concatenate([head_reference(x, wq[h], wk[h], wv[h]) for h in range(NH)], axis=-1)
    ref = jax.block_until_ready(ref)
    np.testing.assert_allclose(np.asarray(out), np.asarray(ref), rtol=5e-4, atol=5e-4)

    # Single-Head module boundary (matches Head.forward output shape/semantics exactly).
    out0 = jax.block_until_ready(head_forward(x, wq[0], wk[0], wv[0]))
    ref0 = jax.block_until_ready(head_reference(x, wq[0], wk[0], wv[0]))
    np.testing.assert_allclose(np.asarray(out0), np.asarray(ref0), rtol=5e-4, atol=5e-4)

    print("KERNEL_OK")
</pallas_src>

<mosaic_0001>
module attributes {stable_mosaic.version = 11 : i64} {
  func.func @_fused_heads_kernel(%arg0: memref<32x32xf32, #tpu.memory_space<vmem>>, %arg1: memref<32x96xf32, #tpu.memory_space<vmem>>, %arg2: memref<32x32xf32, #tpu.memory_space<vmem>>, %arg3: memref<32x32xf32, #tpu.memory_space<vmem>>, %arg4: memref<1xi32, #tpu.memory_space<smem>>, %arg5: memref<32x32xf32, #tpu.memory_space<vmem>>) attributes {dimension_semantics = [], scalar_prefetch = 0 : i64, scratch_operands = 0 : i64, tpu.core_type = #tpu.core_type<tc>} {
    %c0 = arith.constant 0 : index
    %c0_0 = arith.constant 0 : index
    %0 = vector.load %arg0[%c0, %c0_0] : memref<32x32xf32, #tpu.memory_space<vmem>>, vector<32x32xf32>
    %c0_1 = arith.constant 0 : index
    %c0_2 = arith.constant 0 : index
    %1 = vector.load %arg1[%c0_1, %c0_2] : memref<32x96xf32, #tpu.memory_space<vmem>>, vector<32x96xf32>
    %cst = arith.constant dense<0.000000e+00> : vector<32x96xf32>
    %2 = tpu.matmul %0, %1, %cst {dimension_numbers = #tpu.dot_dimension_numbers<[1], [0], [0], [1], [0, 0, 1, 1], [], []>} : vector<32x32xf32>, vector<32x96xf32>, vector<32x96xf32> -> vector<32x96xf32>
    %c0_3 = arith.constant 0 : index
    %c0_4 = arith.constant 0 : index
    %3 = vector.load %arg2[%c0_3, %c0_4] : memref<32x32xf32, #tpu.memory_space<vmem>>, vector<32x16xf32>
    %c0_5 = arith.constant 0 : index
    %c16 = arith.constant 16 : index
    %4 = vector.load %arg2[%c0_5, %c16] : memref<32x32xf32, #tpu.memory_space<vmem>>, vector<32x16xf32>
    %5 = vector.extract_strided_slice %2 {offsets = [0, 0], sizes = [32, 16], strides = [1, 1]} : vector<32x96xf32> to vector<32x16xf32>
    %6 = vector.extract_strided_slice %2 {offsets = [0, 16], sizes = [32, 16], strides = [1, 1]} : vector<32x96xf32> to vector<32x16xf32>
    %7 = vector.extract_strided_slice %2 {offsets = [0, 32], sizes = [32, 16], strides = [1, 1]} : vector<32x96xf32> to vector<32x16xf32>
    %8 = vector.extract_strided_slice %2 {offsets = [0, 48], sizes = [32, 16], strides = [1, 1]} : vector<32x96xf32> to vector<32x16xf32>
    %9 = vector.extract_strided_slice %2 {offsets = [0, 64], sizes = [32, 32], strides = [1, 1]} : vector<32x96xf32> to vector<32x32xf32>
    %10 = arith.mulf %5, %3 : vector<32x16xf32>
    %11 = arith.mulf %6, %4 : vector<32x16xf32>
    %12 = arith.subf %10, %11 : vector<32x16xf32>
    %13 = arith.mulf %5, %4 : vector<32x16xf32>
    %14 = arith.mulf %6, %3 : vector<32x16xf32>
    %15 = arith.addf %13, %14 : vector<32x16xf32>
    %16 = arith.mulf %7, %3 : vector<32x16xf32>
    %17 = arith.mulf %8, %4 : vector<32x16xf32>
    %18 = arith.subf %16, %17 : vector<32x16xf32>
    %19 = arith.mulf %7, %4 : vector<32x16xf32>
    %20 = arith.mulf %8, %3 : vector<32x16xf32>
    %21 = arith.addf %19, %20 : vector<32x16xf32>
    %c0_6 = arith.constant 0 : index
    %c0_7 = arith.constant 0 : index
    %22 = vector.load %arg3[%c0_6, %c0_7] : memref<32x32xf32, #tpu.memory_space<vmem>>, vector<32x32xf32>
    %23 = vector.extract_strided_slice %12 {offsets = [0, 0], sizes = [32, 8], strides = [1, 1]} : vector<32x16xf32> to vector<32x8xf32>
    %24 = vector.extract_strided_slice %15 {offsets = [0, 0], sizes = [32, 8], strides = [1, 1]} : vector<32x16xf32> to vector<32x8xf32>
    %25 = tpu.concatenate %23, %24 in 1 : vector<32x8xf32>, vector<32x8xf32> -> vector<32x16xf32>
    %26 = vector.extract_strided_slice %18 {offsets = [0, 0], sizes = [32, 8], strides = [1, 1]} : vector<32x16xf32> to vector<32x8xf32>
    %27 = vector.extract_strided_slice %21 {offsets = [0, 0], sizes = [32, 8], strides = [1, 1]} : vector<32x16xf32> to vector<32x8xf32>
    %28 = tpu.concatenate %26, %27 in 1 : vector<32x8xf32>, vector<32x8xf32> -> vector<32x16xf32>
    %cst_8 = arith.constant dense<0.000000e+00> : vector<32x32xf32>
    %29 = tpu.matmul %25, %28, %cst_8 {dimension_numbers = #tpu.dot_dimension_numbers<[1], [1], [0], [0], [0, 0, 1, 0], [], []>} : vector<32x16xf32>, vector<32x16xf32>, vector<32x32xf32> -> vector<32x32xf32>
    %30 = arith.addf %29, %22 : vector<32x32xf32>
    %cst_9 = arith.constant dense<0xFF800000> : vector<32xf32>
    %31 = vector.multi_reduction <maximumf>, %30, %cst_9 [1] : vector<32x32xf32> to vector<32xf32>
    %32 = vector.shape_cast %31 : vector<32xf32> to vector<32x1xf32>
    %33 = vector.broadcast %32 : vector<32x1xf32> to vector<32x32xf32>
    %34 = arith.subf %30, %33 : vector<32x32xf32>
    %35 = math.exp %34 : vector<32x32xf32>
    %cst_10 = arith.constant dense<0.000000e+00> : vector<32xf32>
    %36 = vector.multi_reduction <add>, %35, %cst_10 [1] : vector<32x32xf32> to vector<32xf32>
    %37 = vector.shape_cast %36 : vector<32xf32> to vector<32x1xf32>
    %38 = vector.broadcast %37 : vector<32x1xf32> to vector<32x32xf32>
    %39 = arith.divf %35, %38 : vector<32x32xf32>
    %40 = vector.extract_strided_slice %9 {offsets = [0, 0], sizes = [32, 16], strides = [1, 1]} : vector<32x32xf32> to vector<32x16xf32>
    %cst_11 = arith.constant dense<0.000000e+00> : vector<32x16xf32>
    %41 = tpu.matmul %39, %40, %cst_11 {dimension_numbers = #tpu.dot_dimension_numbers<[1], [0], [0], [1], [0, 0, 1, 1], [], []>} : vector<32x32xf32>, vector<32x16xf32>, vector<32x16xf32> -> vector<32x16xf32>
    %42 = vector.extract_strided_slice %12 {offsets = [0, 8], sizes = [32, 8], strides = [1, 1]} : vector<32x16xf32> to vector<32x8xf32>
    %43 = vector.extract_strided_slice %15 {offsets = [0, 8], sizes = [32, 8], strides = [1, 1]} : vector<32x16xf32> to vector<32x8xf32>
    %44 = tpu.concatenate %42, %43 in 1 : vector<32x8xf32>, vector<32x8xf32> -> vector<32x16xf32>
    %45 = vector.extract_strided_slice %18 {offsets = [0, 8], sizes = [32, 8], strides = [1, 1]} : vector<32x16xf32> to vector<32x8xf32>
    %46 = vector.extract_strided_slice %21 {offsets = [0, 8], sizes = [32, 8], strides = [1, 1]} : vector<32x16xf32> to vector<32x8xf32>
    %47 = tpu.concatenate %45, %46 in 1 : vector<32x8xf32>, vector<32x8xf32> -> vector<32x16xf32>
    %cst_12 = arith.constant dense<0.000000e+00> : vector<32x32xf32>
    %48 = tpu.matmul %44, %47, %cst_12 {dimension_numbers = #tpu.dot_dimension_numbers<[1], [1], [0], [0], [0, 0, 1, 0], [], []>} : vector<32x16xf32>, vector<32x16xf32>, vector<32x32xf32> -> vector<32x32xf32>
    %49 = arith.addf %48, %22 : vector<32x32xf32>
    %cst_13 = arith.constant dense<0xFF800000> : vector<32xf32>
    %50 = vector.multi_reduction <maximumf>, %49, %cst_13 [1] : vector<32x32xf32> to vector<32xf32>
    %51 = vector.shape_cast %50 : vector<32xf32> to vector<32x1xf32>
    %52 = vector.broadcast %51 : vector<32x1xf32> to vector<32x32xf32>
    %53 = arith.subf %49, %52 : vector<32x32xf32>
    %54 = math.exp %53 : vector<32x32xf32>
    %cst_14 = arith.constant dense<0.000000e+00> : vector<32xf32>
    %55 = vector.multi_reduction <add>, %54, %cst_14 [1] : vector<32x32xf32> to vector<32xf32>
    %56 = vector.shape_cast %55 : vector<32xf32> to vector<32x1xf32>
    %57 = vector.broadcast %56 : vector<32x1xf32> to vector<32x32xf32>
    %58 = arith.divf %54, %57 : vector<32x32xf32>
    %59 = vector.extract_strided_slice %9 {offsets = [0, 16], sizes = [32, 16], strides = [1, 1]} : vector<32x32xf32> to vector<32x16xf32>
    %cst_15 = arith.constant dense<0.000000e+00> : vector<32x16xf32>
    %60 = tpu.matmul %58, %59, %cst_15 {dimension_numbers = #tpu.dot_dimension_numbers<[1], [0], [0], [1], [0, 0, 1, 1], [], []>} : vector<32x32xf32>, vector<32x16xf32>, vector<32x16xf32> -> vector<32x16xf32>
    %61 = tpu.concatenate %41, %60 in 1 : vector<32x16xf32>, vector<32x16xf32> -> vector<32x32xf32>
    %c0_16 = arith.constant 0 : index
    %c0_17 = arith.constant 0 : index
    %62 = vector.load %arg5[%c0_16, %c0_17] : memref<32x32xf32, #tpu.memory_space<vmem>>, vector<32x32xf32>
    tpu.vector_store %arg5[%c0_16, %c0_17], %61 {strides = array<i32>} : memref<32x32xf32, #tpu.memory_space<vmem>>, vector<32x32xf32>,
    return
  }
}

</mosaic_0001>

<llo_original>
// kernel: tpu_custom_call.1
$region0: #{tpu_custom_call.1}
  #allocation0 [shape = 'u32[]', space=smem, size = 0x4, offset = 0x4, fixed_abs, tag = 'smem constant byte address 0x4 - core index']
  #allocation1 [shape = 'u32[144,128]{1,0:T(1,128)}', space=vmem, size = 0x12000, scoped, tag = 'internal scratch']
  #allocation2 [shape = 's32[1]{0:T(128)S(6)}', space=smem, size = 0x200, scoped, tag = 'scoped memory for tpu_custom_call.1']
  %s0 = inlined_call_operand.hbm [shape: f32[32,32], index: 0, kind: input, shape index: {}]
  %s1 = inlined_call_operand.hbm [shape: f32[32,96], index: 1, kind: input, shape index: {}]
  %s2 = inlined_call_operand.hbm [shape: f32[32,32], index: 2, kind: input, shape index: {}]
  %s3 = inlined_call_operand.hbm [shape: f32[32,32], index: 3, kind: input, shape index: {}]
  %s4 = inlined_call_operand.<no memory space> [shape: s32[1], index: 4, kind: input, shape index: {}]
  %s5 = inlined_call_operand.hbm [shape: f32[32,32], index: 5, kind: output, shape index: {}]
  %s6 = sld [smem:[#allocation0]]
  $region46: #{tpu_custom_call.1} parent=0
    _
  %s8 = ssub.s32 1, %s6
  %s9 = scalar_select 0, %s8, %s6
  %10 = sst [smem:[#allocation2]] %s4
  $region1: #{tpu_custom_call.1} parent=0
    #allocation3 [shape = 'u8[16384]{0}', space=vmem, size = 0x4000, scoped, tag = 'input window, operand 0, single buffered']
    #allocation4 [shape = 's32[1]{0}', space=sflag, size = 0x4, scoped, tag = 'scoped memory for tpu_custom_call.1']
    #allocation5 [shape = 's32[1]{0}', space=sflag, size = 0x4, scoped, tag = 'scoped memory for tpu_custom_call.1']
    #allocation6 [shape = 'u8[16384]{0}', space=vmem, size = 0x4000, scoped, tag = 'input window, operand 1, single buffered']
    #allocation7 [shape = 's32[1]{0}', space=sflag, size = 0x4, scoped, tag = 'scoped memory for tpu_custom_call.1']
    #allocation8 [shape = 'u8[16384]{0}', space=vmem, size = 0x4000, scoped, tag = 'input window, operand 2, single buffered']
    #allocation9 [shape = 'u8[16384]{0}', space=vmem, size = 0x4000, scoped, tag = 'input window, operand 3, single buffered']
    #allocation10 [shape = 's32[1]{0}', space=sflag, size = 0x4, scoped, tag = 'scoped memory for tpu_custom_call.1']
    #allocation11 [shape = 'u8[16384]{0}', space=vmem, size = 0x4000, scoped, tag = 'output window, operand 0, single buffered']
    %11 = vsyncpa [#allocation4], 0
    %12 = vsyncpa [#allocation7], 0
    %13 = vsyncpa [#allocation10], 0
    %14 = vsyncpa [#allocation5], 0
    // Predicated region
    $region2: #{tpu_custom_call.1} parent=1 // pred_check
      _
    $region3: #{tpu_custom_call.1} parent=1 // pred_check_branch
      %16 = sbr.rel (0) target = $region5
    $region4: #{tpu_custom_call.1} parent=1 // pred_region
      %s18 = ssub.s32 512, 512
      %19 = vsyncadd [#allocation4], %s18
      %s20 = sshll.u32 [#allocation3], 4
      %s21 = int_to_ptr.vmem [resolvable:$true] %s20
      %26 = dma.hbm_to_vmem [thread:$0]  %s0, 512, %s21, [#allocation4], 128, 128, 8
    $region5: #{tpu_custom_call.1} parent=1 // pred_fallthru
      _
    // Predicated region
    $region6: #{tpu_custom_call.1} parent=1 // pred_check
      _
    $region7: #{tpu_custom_call.1} parent=1 // pred_check_branch
      %28 = sbr.rel (0) target = $region9
    $region8: #{tpu_custom_call.1} parent=1 // pred_region
      %s30 = ssub.s32 512, 512
      %31 = vsyncadd [#allocation7], %s30
      %s32 = sshll.u32 [#allocation6], 4
      %s33 = int_to_ptr.vmem [resolvable:$true] %s32
      %38 = dma.hbm_to_vmem [thread:$0]  %s1, 512, %s33, [#allocation7], 128, 128, 8
    $region9: #{tpu_custom_call.1} parent=1 // pred_fallthru
      _
    // Predicated region
    $region10: #{tpu_custom_call.1} parent=1 // pred_check
      _
    $region11: #{tpu_custom_call.1} parent=1 // pred_check_branch
      %40 = sbr.rel (0) target = $region13
    $region12: #{tpu_custom_call.1} parent=1 // pred_region
      %s42 = ssub.s32 512, 512
      %43 = vsyncadd [#allocation7], %s42
      %s44 = sshll.u32 [#allocation8], 4
      %s45 = int_to_ptr.vmem [resolvable:$true] %s44
      %50 = dma.hbm_to_vmem [thread:$0]  %s2, 512, %s45, [#allocation7], 128, 128, 8
    $region13: #{tpu_custom_call.1} parent=1 // pred_fallthru
      _
    // Predicated region
    $region14: #{tpu_custom_call.1} parent=1 // pred_check
      _
    $region15: #{tpu_custom_call.1} parent=1 // pred_check_branch
      %52 = sbr.rel (0) target = $region17
    $region16: #{tpu_custom_call.1} parent=1 // pred_region
      %s54 = ssub.s32 512, 512
      %55 = vsyncadd [#allocation10], %s54
      %s56 = sshll.u32 [#allocation9], 4
      %s57 = int_to_ptr.vmem [resolvable:$true] %s56
      %62 = dma.hbm_to_vmem [thread:$0]  %s3, 512, %s57, [#allocation10], 128, 128, 8
    $region17: #{tpu_custom_call.1} parent=1 // pred_fallthru
      _
    // Predicated region
    $region18: #{tpu_custom_call.1} parent=1 // pred_check
      _
    $region19: #{tpu_custom_call.1} parent=1 // pred_check_branch
      %64 = sbr.rel (0) target = $region21
    $region20: #{tpu_custom_call.1} parent=1 // pred_region
      _
    $region21: #{tpu_custom_call.1} parent=1 // pred_fallthru
      _
    // Predicated region
    $region22: #{tpu_custom_call.1} parent=1 // pred_check
      _
    $region23: #{tpu_custom_call.1} parent=1 // pred_check_branch
      %66 = sbr.rel (0) target = $region25
    $region24: #{tpu_custom_call.1} parent=1 // pred_region
      %67 = dma.done [#allocation4], 512
    $region25: #{tpu_custom_call.1} parent=1 // pred_fallthru
      _
    // Predicated region
    $region26: #{tpu_custom_call.1} parent=1 // pred_check
      _
    $region27: #{tpu_custom_call.1} parent=1 // pred_check_branch
      %69 = sbr.rel (0) target = $region29
    $region28: #{tpu_custom_call.1} parent=1 // pred_region
      %70 = dma.done [#allocation7], 512
    $region29: #{tpu_custom_call.1} parent=1 // pred_fallthru
      _
    // Predicated region
    $region30: #{tpu_custom_call.1} parent=1 // pred_check
      _
    $region31: #{tpu_custom_call.1} parent=1 // pred_check_branch
      %72 = sbr.rel (0) target = $region33
    $region32: #{tpu_custom_call.1} parent=1 // pred_region
      %73 = dma.done [#allocation7], 512
    $region33: #{tpu_custom_call.1} parent=1 // pred_fallthru
      _
    // Predicated region
    $region34: #{tpu_custom_call.1} parent=1 // pred_check
      _
    $region35: #{tpu_custom_call.1} parent=1 // pred_check_branch
      %75 = sbr.rel (0) target = $region37
    $region36: #{tpu_custom_call.1} parent=1 // pred_region
      %76 = dma.done [#allocation10], 512
    $region37: #{tpu_custom_call.1} parent=1 // pred_fallthru
      _
    %v77 = vld [vmem:[#allocation3] sm:$0xff]
    %v78 = vld [vmem:[#allocation3 + $0x8] sm:$0xff]
    %v79 = vld [vmem:[#allocation3 + $0x10] sm:$0xff]
    %v80 = vld [vmem:[#allocation3 + $0x18] sm:$0xff]
    %v81 = vld [vmem:[#allocation6] sm:$0xff]
    %v82 = vld [vmem:[#allocation6 + $0x8] sm:$0xff]
    %v83 = vld [vmem:[#allocation6 + $0x10] sm:$0xff]
    %v84 = vld [vmem:[#allocation6 + $0x18] sm:$0xff]
    %vm85 = vcmask 261120
    %v87 = vsel %vm85, %v77, 0
    %v90 = vsel %vm85, %v78, 0
    %v93 = vsel %vm85, %v79, 0
    %v96 = vsel %vm85, %v80, 0
    %98 = vmatprep.subr.mxu0 0.0
    %99 = vmatpush1.msra.mxu0 %v81
    %100 = vmatprep.subr.mxu0 0.0
    %101 = vmatpush1.msra.mxu0 %v82
    %102 = vmatprep.subr.mxu0 0.0
    %103 = vmatpush1.msra.mxu0 %v83
    %104 = vmatprep.subr.mxu0 0.0
    %105 = vmatpush1.msra.mxu0 %v84
    %106 = vmatprep.subr.mxu0 0.0
    %107 = vmatpush1.msra.mxu0 0.0
    %108 = vmatprep.subr.mxu0 0.0
    %109 = vmatpush1.msra.mxu0 0.0
    %110 = vmatprep.subr.mxu0 0.0
    %111 = vmatpush1.msra.mxu0 0.0
    %112 = vmatprep.subr.mxu0 0.0
    %113 = vmatpush1.msra.mxu0 0.0
    %114 = vmatprep.subr.mxu0 0.0
    %115 = vmatpush1.msra.mxu0 0.0
    %116 = vmatprep.subr.mxu0 0.0
    %117 = vmatpush1.msra.mxu0 0.0
    %118 = vmatprep.subr.mxu0 0.0
    %119 = vmatpush1.msra.mxu0 0.0
    %120 = vmatprep.subr.mxu0 0.0
    %121 = vmatpush1.msra.mxu0 0.0
    %122 = vmatprep.subr.mxu0 0.0
    %123 = vmatpush1.msra.mxu0 0.0
    %124 = vmatprep.subr.mxu0 0.0
    %125 = vmatpush1.msra.mxu0 0.0
    %126 = vmatprep.subr.mxu0 0.0
    %127 = vmatpush1.msra.mxu0 0.0
    %128 = vmatprep.subr.mxu0 0.0
    %129 = vmatpush1.msra.mxu0 0.0
    %130 = vmatprep.subr.mxu0 0.0
    %131 = vmatpush1.msra.mxu0 0.0
    %132 = vmatprep.subr.mxu0 0.0
    %133 = vmatpush1.msra.mxu0 0.0
    %134 = vmatprep.subr.mxu0 0.0
    %135 = vmatpush1.msra.mxu0 0.0
    %136 = vmatprep.subr.mxu0 0.0
    %137 = vmatpush1.msra.mxu0 0.0
    %138 = vmatprep.subr.mxu0 0.0
    %139 = vmatpush1.msra.mxu0 0.0
    %140 = vmatprep.subr.mxu0 0.0
    %141 = vmatpush1.msra.mxu0 0.0
    %142 = vmatprep.subr.mxu0 0.0
    %143 = vmatpush1.msra.mxu0 0.0
    %144 = vmatprep.subr.mxu0 0.0
    %145 = vmatpush1.msra.mxu0 0.0
    %146 = vmatprep.subr.mxu0 0.0
    %147 = vmatpush1.msra.mxu0 0.0
    %148 = vmatprep.subr.mxu0 0.0
    %149 = vmatpush1.msra.mxu0 0.0
    %150 = vmatprep.subr.mxu0 0.0
    %151 = vmatpush1.msra.mxu0 0.0
    %152 = vmatprep.subr.mxu0 0.0
    %153 = vmatpush1.msra.mxu0 0.0
    %154 = vmatprep.subr.mxu0 0.0
    %155 = vmatpush1.msra.mxu0 0.0
    %156 = vmatprep.subr.mxu0 0.0
    %157 = vmatpush1.msra.mxu0 0.0
    %158 = vmatprep.subr.mxu0 0.0
    %159 = vmatpush1.msra.mxu0 0.0
    %160 = vmatprep.subr.mxu0 0.0
    %161 = vmatpush1.msra.mxu0 0.0
    %162 = vmatprep.mubr.f32.mxu0 0.0
    %163 = vmatmul.mubr.f32.gmra.mrb[0].mxu0 %v87
    %v164 = vpop.f32.mrb[0].mxu0
    %v165 = vadd.f32 0.0, %v164
    %v166 = vpop.f32.mrb[0].mxu0
    %167 = vmatprep.mubr.f32.mxu0 0.0
    %168 = vmatmul.mubr.f32.gmra.mrb[0].mxu0 %v90
    %v169 = vpop.f32.mrb[0].mxu0
    %v170 = vadd.f32 0.0, %v169
    %v171 = vpop.f32.mrb[0].mxu0
    %172 = vmatprep.mubr.f32.mxu0 0.0
    %173 = vmatmul.mubr.f32.gmra.mrb[0].mxu0 %v93
    %v174 = vpop.f32.mrb[0].mxu0
    %v175 = vadd.f32 0.0, %v174
    %v176 = vpop.f32.mrb[0].mxu0
    %177 = vmatprep.mubr.f32.mxu0 0.0
    %178 = vmatmul.mubr.f32.gmra.mrb[0].mxu0 %v96
    %v179 = vpop.f32.mrb[0].mxu0
    %v180 = vadd.f32 0.0, %v179
    %v181 = vpop.f32.mrb[0].mxu0
    %182 = vdwg.mxu0
    %v183 = vld [vmem:[#allocation8] sm:$0xff]
    %v184 = vld [vmem:[#allocation8 + $0x8] sm:$0xff]
    %v185 = vld [vmem:[#allocation8 + $0x10] sm:$0xff]
    %v186 = vld [vmem:[#allocation8 + $0x18] sm:$0xff]
    %v187 = vmul.f32 %v165, %v183
    %v188 = vmul.f32 %v170, %v184
    %v189 = vmul.f32 %v175, %v185
    %v190 = vmul.f32 %v180, %v186
    %195 = vrot.lane.b32.xlu0 %v187, 112
    %v196 = vpop.permute.xlu0 %195
    %197 = vrot.lane.b32.xlu0 %v188, 112
    %v198 = vpop.permute.xlu0 %197
    %199 = vrot.lane.b32.xlu0 %v189, 112
    %v200 = vpop.permute.xlu0 %199
    %201 = vrot.lane.b32.xlu0 %v190, 112
    %v202 = vpop.permute.xlu0 %201
    %v207 = vsub.f32 %v187, %v196
    %v208 = vsub.f32 %v188, %v198
    %v209 = vsub.f32 %v189, %v200
    %v210 = vsub.f32 %v190, %v202
    %215 = vrot.lane.b32.xlu0 %v183, 112
    %v216 = vpop.permute.xlu0 %215
    %217 = vrot.lane.b32.xlu0 %v184, 112
    %v218 = vpop.permute.xlu0 %217
    %219 = vrot.lane.b32.xlu0 %v185, 112
    %v220 = vpop.permute.xlu0 %219
    %221 = vrot.lane.b32.xlu0 %v186, 112
    %v222 = vpop.permute.xlu0 %221
    %v227 = vmul.f32 %v165, %v216
    %v228 = vmul.f32 %v170, %v218
    %v229 = vmul.f32 %v175, %v220
    %v230 = vmul.f32 %v180, %v222
    %231 = vrot.lane.b32.xlu0 %v183, 16
    %v232 = vpop.permute.xlu0 %231
    %233 = vrot.lane.b32.xlu0 %v184, 16
    %v234 = vpop.permute.xlu0 %233
    %235 = vrot.lane.b32.xlu0 %v185, 16
    %v236 = vpop.permute.xlu0 %235
    %237 = vrot.lane.b32.xlu0 %v186, 16
    %v238 = vpop.permute.xlu0 %237
    %v243 = vmul.f32 %v165, %v232
    %v244 = vmul.f32 %v170, %v234
    %v245 = vmul.f32 %v175, %v236
    %v246 = vmul.f32 %v180, %v238
    %251 = vrot.lane.b32.xlu0 %v243, 112
    %v252 = vpop.permute.xlu0 %251
    %253 = vrot.lane.b32.xlu0 %v244, 112
    %v254 = vpop.permute.xlu0 %253
    %255 = vrot.lane.b32.xlu0 %v245, 112
    %v256 = vpop.permute.xlu0 %255
    %257 = vrot.lane.b32.xlu0 %v246, 112
    %v258 = vpop.permute.xlu0 %257
    %v263 = vadd.f32 %v227, %v252
    %v264 = vadd.f32 %v228, %v254
    %v265 = vadd.f32 %v229, %v256
    %v266 = vadd.f32 %v230, %v258
    %267 = vrot.lane.b32.xlu0 %v183, 32
    %v268 = vpop.permute.xlu0 %267
    %269 = vrot.lane.b32.xlu0 %v184, 32
    %v270 = vpop.permute.xlu0 %269
    %271 = vrot.lane.b32.xlu0 %v185, 32
    %v272 = vpop.permute.xlu0 %271
    %273 = vrot.lane.b32.xlu0 %v186, 32
    %v274 = vpop.permute.xlu0 %273
    %v279 = vmul.f32 %v165, %v268
    %v280 = vmul.f32 %v170, %v270
    %v281 = vmul.f32 %v175, %v272
    %v282 = vmul.f32 %v180, %v274
    %287 = vrot.lane.b32.xlu0 %v279, 112
    %v288 = vpop.permute.xlu0 %287
    %289 = vrot.lane.b32.xlu0 %v280, 112
    %v290 = vpop.permute.xlu0 %289
    %291 = vrot.lane.b32.xlu0 %v281, 112
    %v292 = vpop.permute.xlu0 %291
    %293 = vrot.lane.b32.xlu0 %v282, 112
    %v294 = vpop.permute.xlu0 %293
    %v299 = vsub.f32 %v279, %v288
    %v300 = vsub.f32 %v280, %v290
    %v301 = vsub.f32 %v281, %v292
    %v302 = vsub.f32 %v282, %v294
    %303 = vrot.lane.b32.xlu0 %v183, 48
    %v304 = vpop.permute.xlu0 %303
    %305 = vrot.lane.b32.xlu0 %v184, 48
    %v306 = vpop.permute.xlu0 %305
    %307 = vrot.lane.b32.xlu0 %v185, 48
    %v308 = vpop.permute.xlu0 %307
    %309 = vrot.lane.b32.xlu0 %v186, 48
    %v310 = vpop.permute.xlu0 %309
    %v315 = vmul.f32 %v165, %v304
    %v316 = vmul.f32 %v170, %v306
    %v317 = vmul.f32 %v175, %v308
    %v318 = vmul.f32 %v180, %v310
    %323 = vrot.lane.b32.xlu0 %v315, 112
    %v324 = vpop.permute.xlu0 %323
    %325 = vrot.lane.b32.xlu0 %v316, 112
    %v326 = vpop.permute.xlu0 %325
    %327 = vrot.lane.b32.xlu0 %v317, 112
    %v328 = vpop.permute.xlu0 %327
    %329 = vrot.lane.b32.xlu0 %v318, 112
    %v330 = vpop.permute.xlu0 %329
    %v335 = vadd.f32 %v243, %v324
    %v336 = vadd.f32 %v244, %v326
    %v337 = vadd.f32 %v245, %v328
    %v338 = vadd.f32 %v246, %v330
    %v339 = vld [vmem:[#allocation9] sm:$0xff]
    %v340 = vld [vmem:[#allocation9 + $0x8] sm:$0xff]
    %v341 = vld [vmem:[#allocation9 + $0x10] sm:$0xff]
    %v342 = vld [vmem:[#allocation9 + $0x18] sm:$0xff]
    %347 = vrot.lane.b32.xlu0 %v263, 8
    %v348 = vpop.permute.xlu0 %347
    %349 = vrot.lane.b32.xlu0 %v264, 8
    %v350 = vpop.permute.xlu0 %349
    %351 = vrot.lane.b32.xlu0 %v265, 8
    %v352 = vpop.permute.xlu0 %351
    %353 = vrot.lane.b32.xlu0 %v266, 8
    %v354 = vpop.permute.xlu0 %353
    %vm359 = vcmask 64512
    %v360 = vsel %vm359, %v207, %v348
    %v361 = vsel %vm359, %v208, %v350
    %v362 = vsel %vm359, %v209, %v352
    %v363 = vsel %vm359, %v210, %v354
    %368 = vrot.lane.b32.xlu0 %v299, 96
    %v369 = vpop.permute.xlu0 %368
    %370 = vrot.lane.b32.xlu0 %v300, 96
    %v371 = vpop.permute.xlu0 %370
    %372 = vrot.lane.b32.xlu0 %v301, 96
    %v373 = vpop.permute.xlu0 %372
    %374 = vrot.lane.b32.xlu0 %v302, 96
    %v375 = vpop.permute.xlu0 %374
    %384 = vrot.lane.b32.xlu0 %v335, 104
    %v385 = vpop.permute.xlu0 %384
    %386 = vrot.lane.b32.xlu0 %v336, 104
    %v387 = vpop.permute.xlu0 %386
    %388 = vrot.lane.b32.xlu0 %v337, 104
    %v389 = vpop.permute.xlu0 %388
    %390 = vrot.lane.b32.xlu0 %v338, 104
    %v391 = vpop.permute.xlu0 %390
    %v396 = vsel %vm359, %v369, %v385
    %v397 = vsel %vm359, %v371, %v387
    %v398 = vsel %vm359, %v373, %v389
    %v399 = vsel %vm359, %v375, %v391
    %vm400 = vcmask 130048
    %v402 = vsel %vm400, %v360, 0
    %v405 = vsel %vm400, %v361, 0
    %v408 = vsel %vm400, %v362, 0
    %v411 = vsel %vm400, %v363, 0
    %v414 = vsel %vm400, %v396, 0
    %v417 = vsel %vm400, %v397, 0
    %v420 = vsel %vm400, %v398, 0
    %v423 = vsel %vm400, %v399, 0
    %425 = vmatprep.subr.mxu0 0.0
    %426 = vmatpush1.xpose.msra.mxu0 %v414
    %427 = vmatprep.subr.mxu0 0.0
    %428 = vmatpush1.xpose.msra.mxu0 %v417
    %429 = vmatprep.subr.mxu0 0.0
    %430 = vmatpush1.xpose.msra.mxu0 %v420
    %431 = vmatprep.subr.mxu0 0.0
    %432 = vmatpush1.xpose.msra.mxu0 %v423
    %433 = vmatprep.subr.mxu0 0.0
    %434 = vmatpush1.xpose.msra.mxu0 0.0
    %435 = vmatprep.subr.mxu0 0.0
    %436 = vmatpush1.xpose.msra.mxu0 0.0
    %437 = vmatprep.subr.mxu0 0.0
    %438 = vmatpush1.xpose.msra.mxu0 0.0
    %439 = vmatprep.subr.mxu0 0.0
    %440 = vmatpush1.xpose.msra.mxu0 0.0
    %441 = vmatprep.subr.mxu0 0.0
    %442 = vmatpush1.xpose.msra.mxu0 0.0
    %443 = vmatprep.subr.mxu0 0.0
    %444 = vmatpush1.xpose.msra.mxu0 0.0
    %445 = vmatprep.subr.mxu0 0.0
    %446 = vmatpush1.xpose.msra.mxu0 0.0
    %447 = vmatprep.subr.mxu0 0.0
    %448 = vmatpush1.xpose.msra.mxu0 0.0
    %449 = vmatprep.subr.mxu0 0.0
    %450 = vmatpush1.xpose.msra.mxu0 0.0
    %451 = vmatprep.subr.mxu0 0.0
    %452 = vmatpush1.xpose.msra.mxu0 0.0
    %453 = vmatprep.subr.mxu0 0.0
    %454 = vmatpush1.xpose.msra.mxu0 0.0
    %455 = vmatprep.subr.mxu0 0.0
    %456 = vmatpush1.xpose.msra.mxu0 0.0
    %457 = vmatprep.subr.mxu0 0.0
    %458 = vmatpush1.xpose.msra.mxu0 0.0
    %459 = vmatprep.subr.mxu0 0.0
    %460 = vmatpush1.xpose.msra.mxu0 0.0
    %461 = vmatprep.subr.mxu0 0.0
    %462 = vmatpush1.xpose.msra.mxu0 0.0
    %463 = vmatprep.subr.mxu0 0.0
    %464 = vmatpush1.xpose.msra.mxu0 0.0
    %465 = vmatprep.subr.mxu0 0.0
    %466 = vmatpush1.xpose.msra.mxu0 0.0
    %467 = vmatprep.subr.mxu0 0.0
    %468 = vmatpush1.xpose.msra.mxu0 0.0
    %469 = vmatprep.subr.mxu0 0.0
    %470 = vmatpush1.xpose.msra.mxu0 0.0
    %471 = vmatprep.subr.mxu0 0.0
    %472 = vmatpush1.xpose.msra.mxu0 0.0
    %473 = vmatprep.subr.mxu0 0.0
    %474 = vmatpush1.xpose.msra.mxu0 0.0
    %475 = vmatprep.subr.mxu0 0.0
    %476 = vmatpush1.xpose.msra.mxu0 0.0
    %477 = vmatprep.subr.mxu0 0.0
    %478 = vmatpush1.xpose.msra.mxu0 0.0
    %479 = vmatprep.subr.mxu0 0.0
    %480 = vmatpush1.xpose.msra.mxu0 0.0
    %481 = vmatprep.subr.mxu0 0.0
    %482 = vmatpush1.xpose.msra.mxu0 0.0
    %483 = vmatprep.subr.mxu0 0.0
    %484 = vmatpush1.xpose.msra.mxu0 0.0
    %485 = vmatprep.subr.mxu0 0.0
    %486 = vmatpush1.xpose.msra.mxu0 0.0
    %487 = vmatprep.subr.mxu0 0.0
    %488 = vmatpush1.xpose.msra.mxu0 0.0
    %489 = vmatprep.mubr.f32.mxu0 0.0
    %490 = vmatmul.mubr.f32.gmra.mrb[0].mxu0 %v402
    %v491 = vpop.f32.mrb[0].mxu0
    %v492 = vadd.f32 %v339, %v491
    %v493 = vpop.f32.mrb[0].mxu0
    %494 = vmatprep.mubr.f32.mxu0 0.0
    %495 = vmatmul.mubr.f32.gmra.mrb[0].mxu0 %v405
    %v496 = vpop.f32.mrb[0].mxu0
    %v497 = vadd.f32 %v340, %v496
    %v498 = vpop.f32.mrb[0].mxu0
    %499 = vmatprep.mubr.f32.mxu0 0.0
    %500 = vmatmul.mubr.f32.gmra.mrb[0].mxu0 %v408
    %v501 = vpop.f32.mrb[0].mxu0
    %v502 = vadd.f32 %v341, %v501
    %v503 = vpop.f32.mrb[0].mxu0
    %504 = vmatprep.mubr.f32.mxu0 0.0
    %505 = vmatmul.mubr.f32.gmra.mrb[0].mxu0 %v411
    %v506 = vpop.f32.mrb[0].mxu0
    %v507 = vadd.f32 %v342, %v506
    %v508 = vpop.f32.mrb[0].mxu0
    %509 = vdwg.mxu0
    %v510 = vsel %vm85, %v492, -inf
    %511 = vmax.xlane.f32.xlu0 %v510
    %v512 = vpop.xlane.xlu0 %511
    %v513 = vsel %vm85, %v497, -inf
    %514 = vmax.xlane.f32.xlu0 %v513
    %v515 = vpop.xlane.xlu0 %514
    %v516 = vsel %vm85, %v502, -inf
    %517 = vmax.xlane.f32.xlu0 %v516
    %v518 = vpop.xlane.xlu0 %517
    %v519 = vsel %vm85, %v507, -inf
    %520 = vmax.xlane.f32.xlu0 %v519
    %v521 = vpop.xlane.xlu0 %520
    %v522 = vsub.f32 %v492, %v512
    %v523 = vsub.f32 %v497, %v515
    %v524 = vsub.f32 %v502, %v518
    %v525 = vsub.f32 %v507, %v521
    %v526 = vmul.f32 %v522, 1.442695
    %v527 = vpow.pop %v526
    %v528 = vmul.f32 %v523, 1.442695
    %v529 = vpow.pop %v528
    %v530 = vmul.f32 %v524, 1.442695
    %v531 = vpow.pop %v530
    %v532 = vmul.f32 %v525, 1.442695
    %v533 = vpow.pop %v532
    %v534 = vsel %vm85, %v527, 0.0
    %535 = vadd.xlane.f32.xlu0 %v534
    %v536 = vpop.xlane.xlu0 %535
    %v537 = vsel %vm85, %v529, 0.0
    %538 = vadd.xlane.f32.xlu0 %v537
    %v539 = vpop.xlane.xlu0 %538
    %v540 = vsel %vm85, %v531, 0.0
    %541 = vadd.xlane.f32.xlu0 %v540
    %v542 = vpop.xlane.xlu0 %541
    %v543 = vsel %vm85, %v533, 0.0
    %544 = vadd.xlane.f32.xlu0 %v543
    %v545 = vpop.xlane.xlu0 %544
    %v546 = vrcp.pop %v536
    %v547 = vmul.f32 %v527, %v546
    %v548 = vrcp.pop %v539
    %v549 = vmul.f32 %v529, %v548
    %v550 = vrcp.pop %v542
    %v551 = vmul.f32 %v531, %v550
    %v552 = vrcp.pop %v545
    %v553 = vmul.f32 %v533, %v552
    %558 = vrot.lane.b32.xlu0 %v165, 64
    %v559 = vpop.permute.xlu0 %558
    %560 = vrot.lane.b32.xlu0 %v170, 64
    %v561 = vpop.permute.xlu0 %560
    %562 = vrot.lane.b32.xlu0 %v175, 64
    %v563 = vpop.permute.xlu0 %562
    %564 = vrot.lane.b32.xlu0 %v180, 64
    %v565 = vpop.permute.xlu0 %564
    %v571 = vsel %vm85, %v547, 0
    %v574 = vsel %vm85, %v549, 0
    %v577 = vsel %vm85, %v551, 0
    %v580 = vsel %vm85, %v553, 0
    %582 = vmatprep.subr.mxu0 0.0
    %583 = vmatpush1.msra.mxu0 %v559
    %584 = vmatprep.subr.mxu0 0.0
    %585 = vmatpush1.msra.mxu0 %v561
    %586 = vmatprep.subr.mxu0 0.0
    %587 = vmatpush1.msra.mxu0 %v563
    %588 = vmatprep.subr.mxu0 0.0
    %589 = vmatpush1.msra.mxu0 %v565
    %590 = vmatprep.subr.mxu0 0.0
    %591 = vmatpush1.msra.mxu0 0.0
    %592 = vmatprep.subr.mxu0 0.0
    %593 = vmatpush1.msra.mxu0 0.0
    %594 = vmatprep.subr.mxu0 0.0
    %595 = vmatpush1.msra.mxu0 0.0
    %596 = vmatprep.subr.mxu0 0.0
    %597 = vmatpush1.msra.mxu0 0.0
    %598 = vmatprep.subr.mxu0 0.0
    %599 = vmatpush1.msra.mxu0 0.0
    %600 = vmatprep.subr.mxu0 0.0
    %601 = vmatpush1.msra.mxu0 0.0
    %602 = vmatprep.subr.mxu0 0.0
    %603 = vmatpush1.msra.mxu0 0.0
    %604 = vmatprep.subr.mxu0 0.0
    %605 = vmatpush1.msra.mxu0 0.0
    %606 = vmatprep.subr.mxu0 0.0
    %607 = vmatpush1.msra.mxu0 0.0
    %608 = vmatprep.subr.mxu0 0.0
    %609 = vmatpush1.msra.mxu0 0.0
    %610 = vmatprep.subr.mxu0 0.0
    %611 = vmatpush1.msra.mxu0 0.0
    %612 = vmatprep.subr.mxu0 0.0
    %613 = vmatpush1.msra.mxu0 0.0
    %614 = vmatprep.subr.mxu0 0.0
    %615 = vmatpush1.msra.mxu0 0.0
    %616 = vmatprep.subr.mxu0 0.0
    %617 = vmatpush1.msra.mxu0 0.0
    %618 = vmatprep.subr.mxu0 0.0
    %619 = vmatpush1.msra.mxu0 0.0
    %620 = vmatprep.subr.mxu0 0.0
    %621 = vmatpush1.msra.mxu0 0.0
    %622 = vmatprep.subr.mxu0 0.0
    %623 = vmatpush1.msra.mxu0 0.0
    %624 = vmatprep.subr.mxu0 0.0
    %625 = vmatpush1.msra.mxu0 0.0
    %626 = vmatprep.subr.mxu0 0.0
    %627 = vmatpush1.msra.mxu0 0.0
    %628 = vmatprep.subr.mxu0 0.0
    %629 = vmatpush1.msra.mxu0 0.0
    %630 = vmatprep.subr.mxu0 0.0
    %631 = vmatpush1.msra.mxu0 0.0
    %632 = vmatprep.subr.mxu0 0.0
    %633 = vmatpush1.msra.mxu0 0.0
    %634 = vmatprep.subr.mxu0 0.0
    %635 = vmatpush1.msra.mxu0 0.0
    %636 = vmatprep.subr.mxu0 0.0
    %637 = vmatpush1.msra.mxu0 0.0
    %638 = vmatprep.subr.mxu0 0.0
    %639 = vmatpush1.msra.mxu0 0.0
    %640 = vmatprep.subr.mxu0 0.0
    %641 = vmatpush1.msra.mxu0 0.0
    %642 = vmatprep.subr.mxu0 0.0
    %643 = vmatpush1.msra.mxu0 0.0
    %644 = vmatprep.subr.mxu0 0.0
    %645 = vmatpush1.msra.mxu0 0.0
    %646 = vmatprep.mubr.f32.mxu0 0.0
    %647 = vmatmul.mubr.f32.gmra.mrb[0].mxu0 %v571
    %v648 = vpop.f32.mrb[0].mxu0
    %v649 = vadd.f32 0.0, %v648
    %v650 = vpop.f32.mrb[0].mxu0
    %651 = vmatprep.mubr.f32.mxu0 0.0
    %652 = vmatmul.mubr.f32.gmra.mrb[0].mxu0 %v574
    %v653 = vpop.f32.mrb[0].mxu0
    %v654 = vadd.f32 0.0, %v653
    %v655 = vpop.f32.mrb[0].mxu0
    %656 = vmatprep.mubr.f32.mxu0 0.0
    %657 = vmatmul.mubr.f32.gmra.mrb[0].mxu0 %v577
    %v658 = vpop.f32.mrb[0].mxu0
    %v659 = vadd.f32 0.0, %v658
    %v660 = vpop.f32.mrb[0].mxu0
    %661 = vmatprep.mubr.f32.mxu0 0.0
    %662 = vmatmul.mubr.f32.gmra.mrb[0].mxu0 %v580
    %v663 = vpop.f32.mrb[0].mxu0
    %v664 = vadd.f32 0.0, %v663
    %v665 = vpop.f32.mrb[0].mxu0
    %666 = vdwg.mxu0
    %671 = vrot.lane.b32.xlu0 %v207, 120
    %v672 = vpop.permute.xlu0 %671
    %673 = vrot.lane.b32.xlu0 %v208, 120
    %v674 = vpop.permute.xlu0 %673
    %675 = vrot.lane.b32.xlu0 %v209, 120
    %v676 = vpop.permute.xlu0 %675
    %677 = vrot.lane.b32.xlu0 %v210, 120
    %v678 = vpop.permute.xlu0 %677
    %v683 = vsel %vm359, %v672, %v263
    %v684 = vsel %vm359, %v674, %v264
    %v685 = vsel %vm359, %v676, %v265
    %v686 = vsel %vm359, %v678, %v266
    %687 = vrot.lane.b32.xlu0 %v299, 88
    %v688 = vpop.permute.xlu0 %687
    %689 = vrot.lane.b32.xlu0 %v300, 88
    %v690 = vpop.permute.xlu0 %689
    %691 = vrot.lane.b32.xlu0 %v301, 88
    %v692 = vpop.permute.xlu0 %691
    %693 = vrot.lane.b32.xlu0 %v302, 88
    %v694 = vpop.permute.xlu0 %693
    %699 = vrot.lane.b32.xlu0 %v335, 96
    %v700 = vpop.permute.xlu0 %699
    %701 = vrot.lane.b32.xlu0 %v336, 96
    %v702 = vpop.permute.xlu0 %701
    %703 = vrot.lane.b32.xlu0 %v337, 96
    %v704 = vpop.permute.xlu0 %703
    %705 = vrot.lane.b32.xlu0 %v338, 96
    %v706 = vpop.permute.xlu0 %705
    %v711 = vsel %vm359, %v688, %v700
    %v712 = vsel %vm359, %v690, %v702
    %v713 = vsel %vm359, %v692, %v704
    %v714 = vsel %vm359, %v694, %v706
    %v716 = vsel %vm400, %v683, 0
    %v719 = vsel %vm400, %v684, 0
    %v722 = vsel %vm400, %v685, 0
    %v725 = vsel %vm400, %v686, 0
    %v728 = vsel %vm400, %v711, 0
    %v731 = vsel %vm400, %v712, 0
    %v734 = vsel %vm400, %v713, 0
    %v737 = vsel %vm400, %v714, 0
    %739 = vmatprep.subr.mxu0 0.0
    %740 = vmatpush1.xpose.msra.mxu0 %v728
    %741 = vmatprep.subr.mxu0 0.0
    %742 = vmatpush1.xpose.msra.mxu0 %v731
    %743 = vmatprep.subr.mxu0 0.0
    %744 = vmatpush1.xpose.msra.mxu0 %v734
    %745 = vmatprep.subr.mxu0 0.0
    %746 = vmatpush1.xpose.msra.mxu0 %v737
    %747 = vmatprep.subr.mxu0 0.0
    %748 = vmatpush1.xpose.msra.mxu0 0.0
    %749 = vmatprep.subr.mxu0 0.0
    %750 = vmatpush1.xpose.msra.mxu0 0.0
    %751 = vmatprep.subr.mxu0 0.0
    %752 = vmatpush1.xpose.msra.mxu0 0.0
    %753 = vmatprep.subr.mxu0 0.0
    %754 = vmatpush1.xpose.msra.mxu0 0.0
    %755 = vmatprep.subr.mxu0 0.0
    %756 = vmatpush1.xpose.msra.mxu0 0.0
    %757 = vmatprep.subr.mxu0 0.0
    %758 = vmatpush1.xpose.msra.mxu0 0.0
    %759 = vmatprep.subr.mxu0 0.0
    %760 = vmatpush1.xpose.msra.mxu0 0.0
    %761 = vmatprep.subr.mxu0 0.0
    %762 = vmatpush1.xpose.msra.mxu0 0.0
    %763 = vmatprep.subr.mxu0 0.0
    %764 = vmatpush1.xpose.msra.mxu0 0.0
    %765 = vmatprep.subr.mxu0 0.0
    %766 = vmatpush1.xpose.msra.mxu0 0.0
    %767 = vmatprep.subr.mxu0 0.0
    %768 = vmatpush1.xpose.msra.mxu0 0.0
    %769 = vmatprep.subr.mxu0 0.0
    %770 = vmatpush1.xpose.msra.mxu0 0.0
    %771 = vmatprep.subr.mxu0 0.0
    %772 = vmatpush1.xpose.msra.mxu0 0.0
    %773 = vmatprep.subr.mxu0 0.0
    %774 = vmatpush1.xpose.msra.mxu0 0.0
    %775 = vmatprep.subr.mxu0 0.0
    %776 = vmatpush1.xpose.msra.mxu0 0.0
    %777 = vmatprep.subr.mxu0 0.0
    %778 = vmatpush1.xpose.msra.mxu0 0.0
    %779 = vmatprep.subr.mxu0 0.0
    %780 = vmatpush1.xpose.msra.mxu0 0.0
    %781 = vmatprep.subr.mxu0 0.0
    %782 = vmatpush1.xpose.msra.mxu0 0.0
    %783 = vmatprep.subr.mxu0 0.0
    %784 = vmatpush1.xpose.msra.mxu0 0.0
    %785 = vmatprep.subr.mxu0 0.0
    %786 = vmatpush1.xpose.msra.mxu0 0.0
    %787 = vmatprep.subr.mxu0 0.0
    %788 = vmatpush1.xpose.msra.mxu0 0.0
    %789 = vmatprep.subr.mxu0 0.0
    %790 = vmatpush1.xpose.msra.mxu0 0.0
    %791 = vmatprep.subr.mxu0 0.0
    %792 = vmatpush1.xpose.msra.mxu0 0.0
    %793 = vmatprep.subr.mxu0 0.0
    %794 = vmatpush1.xpose.msra.mxu0 0.0
    %795 = vmatprep.subr.mxu0 0.0
    %796 = vmatpush1.xpose.msra.mxu0 0.0
    %797 = vmatprep.subr.mxu0 0.0
    %798 = vmatpush1.xpose.msra.mxu0 0.0
    %799 = vmatprep.subr.mxu0 0.0
    %800 = vmatpush1.xpose.msra.mxu0 0.0
    %801 = vmatprep.subr.mxu0 0.0
    %802 = vmatpush1.xpose.msra.mxu0 0.0
    %803 = vmatprep.mubr.f32.mxu0 0.0
    %804 = vmatmul.mubr.f32.gmra.mrb[0].mxu0 %v716
    %v805 = vpop.f32.mrb[0].mxu0
    %v806 = vadd.f32 %v339, %v805
    %v807 = vpop.f32.mrb[0].mxu0
    %808 = vmatprep.mubr.f32.mxu0 0.0
    %809 = vmatmul.mubr.f32.gmra.mrb[0].mxu0 %v719
    %v810 = vpop.f32.mrb[0].mxu0
    %v811 = vadd.f32 %v340, %v810
    %v812 = vpop.f32.mrb[0].mxu0
    %813 = vmatprep.mubr.f32.mxu0 0.0
    %814 = vmatmul.mubr.f32.gmra.mrb[0].mxu0 %v722
    %v815 = vpop.f32.mrb[0].mxu0
    %v816 = vadd.f32 %v341, %v815
    %v817 = vpop.f32.mrb[0].mxu0
    %818 = vmatprep.mubr.f32.mxu0 0.0
    %819 = vmatmul.mubr.f32.gmra.mrb[0].mxu0 %v725
    %v820 = vpop.f32.mrb[0].mxu0
    %v821 = vadd.f32 %v342, %v820
    %v822 = vpop.f32.mrb[0].mxu0
    %823 = vdwg.mxu0
    %v824 = vsel %vm85, %v806, -inf
    %825 = vmax.xlane.f32.xlu0 %v824
    %v826 = vpop.xlane.xlu0 %825
    %v827 = vsel %vm85, %v811, -inf
    %828 = vmax.xlane.f32.xlu0 %v827
    %v829 = vpop.xlane.xlu0 %828
    %v830 = vsel %vm85, %v816, -inf
    %831 = vmax.xlane.f32.xlu0 %v830
    %v832 = vpop.xlane.xlu0 %831
    %v833 = vsel %vm85, %v821, -inf
    %834 = vmax.xlane.f32.xlu0 %v833
    %v835 = vpop.xlane.xlu0 %834
    %v836 = vsub.f32 %v806, %v826
    %v837 = vsub.f32 %v811, %v829
    %v838 = vsub.f32 %v816, %v832
    %v839 = vsub.f32 %v821, %v835
    %v840 = vmul.f32 %v836, 1.442695
    %v841 = vpow.pop %v840
    %v842 = vmul.f32 %v837, 1.442695
    %v843 = vpow.pop %v842
    %v844 = vmul.f32 %v838, 1.442695
    %v845 = vpow.pop %v844
    %v846 = vmul.f32 %v839, 1.442695
    %v847 = vpow.pop %v846
    %v848 = vsel %vm85, %v841, 0.0
    %849 = vadd.xlane.f32.xlu0 %v848
    %v850 = vpop.xlane.xlu0 %849
    %v851 = vsel %vm85, %v843, 0.0
    %852 = vadd.xlane.f32.xlu0 %v851
    %v853 = vpop.xlane.xlu0 %852
    %v854 = vsel %vm85, %v845, 0.0
    %855 = vadd.xlane.f32.xlu0 %v854
    %v856 = vpop.xlane.xlu0 %855
    %v857 = vsel %vm85, %v847, 0.0
    %858 = vadd.xlane.f32.xlu0 %v857
    %v859 = vpop.xlane.xlu0 %858
    %v860 = vrcp.pop %v850
    %v861 = vmul.f32 %v841, %v860
    %v862 = vrcp.pop %v853
    %v863 = vmul.f32 %v843, %v862
    %v864 = vrcp.pop %v856
    %v865 = vmul.f32 %v845, %v864
    %v866 = vrcp.pop %v859
    %v867 = vmul.f32 %v847, %v866
    %868 = vrot.lane.b32.xlu0 %v165, 48
    %v869 = vpop.permute.xlu0 %868
    %870 = vrot.lane.b32.xlu0 %v170, 48
    %v871 = vpop.permute.xlu0 %870
    %872 = vrot.lane.b32.xlu0 %v175, 48
    %v873 = vpop.permute.xlu0 %872
    %874 = vrot.lane.b32.xlu0 %v180, 48
    %v875 = vpop.permute.xlu0 %874
    %v881 = vsel %vm85, %v861, 0
    %v884 = vsel %vm85, %v863, 0
    %v887 = vsel %vm85, %v865, 0
    %v890 = vsel %vm85, %v867, 0
    %892 = vmatprep.subr.mxu0 0.0
    %893 = vmatpush1.msra.mxu0 %v869
    %894 = vmatprep.subr.mxu0 0.0
    %895 = vmatpush1.msra.mxu0 %v871
    %896 = vmatprep.subr.mxu0 0.0
    %897 = vmatpush1.msra.mxu0 %v873
    %898 = vmatprep.subr.mxu0 0.0
    %899 = vmatpush1.msra.mxu0 %v875
    %900 = vmatprep.subr.mxu0 0.0
    %901 = vmatpush1.msra.mxu0 0.0
    %902 = vmatprep.subr.mxu0 0.0
    %903 = vmatpush1.msra.mxu0 0.0
    %904 = vmatprep.subr.mxu0 0.0
    %905 = vmatpush1.msra.mxu0 0.0
    %906 = vmatprep.subr.mxu0 0.0
    %907 = vmatpush1.msra.mxu0 0.0
    %908 = vmatprep.subr.mxu0 0.0
    %909 = vmatpush1.msra.mxu0 0.0
    %910 = vmatprep.subr.mxu0 0.0
    %911 = vmatpush1.msra.mxu0 0.0
    %912 = vmatprep.subr.mxu0 0.0
    %913 = vmatpush1.msra.mxu0 0.0
    %914 = vmatprep.subr.mxu0 0.0
    %915 = vmatpush1.msra.mxu0 0.0
    %916 = vmatprep.subr.mxu0 0.0
    %917 = vmatpush1.msra.mxu0 0.0
    %918 = vmatprep.subr.mxu0 0.0
    %919 = vmatpush1.msra.mxu0 0.0
    %920 = vmatprep.subr.mxu0 0.0
    %921 = vmatpush1.msra.mxu0 0.0
    %922 = vmatprep.subr.mxu0 0.0
    %923 = vmatpush1.msra.mxu0 0.0
    %924 = vmatprep.subr.mxu0 0.0
    %925 = vmatpush1.msra.mxu0 0.0
    %926 = vmatprep.subr.mxu0 0.0
    %927 = vmatpush1.msra.mxu0 0.0
    %928 = vmatprep.subr.mxu0 0.0
    %929 = vmatpush1.msra.mxu0 0.0
    %930 = vmatprep.subr.mxu0 0.0
    %931 = vmatpush1.msra.mxu0 0.0
    %932 = vmatprep.subr.mxu0 0.0
    %933 = vmatpush1.msra.mxu0 0.0
    %934 = vmatprep.subr.mxu0 0.0
    %935 = vmatpush1.msra.mxu0 0.0
    %936 = vmatprep.subr.mxu0 0.0
    %937 = vmatpush1.msra.mxu0 0.0
    %938 = vmatprep.subr.mxu0 0.0
    %939 = vmatpush1.msra.mxu0 0.0
    %940 = vmatprep.subr.mxu0 0.0
    %941 = vmatpush1.msra.mxu0 0.0
    %942 = vmatprep.subr.mxu0 0.0
    %943 = vmatpush1.msra.mxu0 0.0
    %944 = vmatprep.subr.mxu0 0.0
    %945 = vmatpush1.msra.mxu0 0.0
    %946 = vmatprep.subr.mxu0 0.0
    %947 = vmatpush1.msra.mxu0 0.0
    %948 = vmatprep.subr.mxu0 0.0
    %949 = vmatpush1.msra.mxu0 0.0
    %950 = vmatprep.subr.mxu0 0.0
    %951 = vmatpush1.msra.mxu0 0.0
    %952 = vmatprep.subr.mxu0 0.0
    %953 = vmatpush1.msra.mxu0 0.0
    %954 = vmatprep.subr.mxu0 0.0
    %955 = vmatpush1.msra.mxu0 0.0
    %956 = vmatprep.mubr.f32.mxu0 0.0
    %957 = vmatmul.mubr.f32.gmra.mrb[0].mxu0 %v881
    %v958 = vpop.f32.mrb[0].mxu0
    %v959 = vadd.f32 0.0, %v958
    %v960 = vpop.f32.mrb[0].mxu0
    %961 = vmatprep.mubr.f32.mxu0 0.0
    %962 = vmatmul.mubr.f32.gmra.mrb[0].mxu0 %v884
    %v963 = vpop.f32.mrb[0].mxu0
    %v964 = vadd.f32 0.0, %v963
    %v965 = vpop.f32.mrb[0].mxu0
    %966 = vmatprep.mubr.f32.mxu0 0.0
    %967 = vmatmul.mubr.f32.gmra.mrb[0].mxu0 %v887
    %v968 = vpop.f32.mrb[0].mxu0
    %v969 = vadd.f32 0.0, %v968
    %v970 = vpop.f32.mrb[0].mxu0
    %971 = vmatprep.mubr.f32.mxu0 0.0
    %972 = vmatmul.mubr.f32.gmra.mrb[0].mxu0 %v890
    %v973 = vpop.f32.mrb[0].mxu0
    %v974 = vadd.f32 0.0, %v973
    %v975 = vpop.f32.mrb[0].mxu0
    %976 = vdwg.mxu0
    %981 = vrot.lane.b32.xlu0 %v959, 16
    %v982 = vpop.permute.xlu0 %981
    %983 = vrot.lane.b32.xlu0 %v964, 16
    %v984 = vpop.permute.xlu0 %983
    %985 = vrot.lane.b32.xlu0 %v969, 16
    %v986 = vpop.permute.xlu0 %985
    %987 = vrot.lane.b32.xlu0 %v974, 16
    %v988 = vpop.permute.xlu0 %987
    %v993 = vsel %vm400, %v649, %v982
    %v994 = vsel %vm400, %v654, %v984
    %v995 = vsel %vm400, %v659, %v986
    %v996 = vsel %vm400, %v664, %v988
    %997 = vst.msk [vmem:[#allocation11] sm:$0xff] %vm85, %v993
    %998 = vst.msk [vmem:[#allocation11 + $0x8] sm:$0xff] %vm85, %v994
    %999 = vst.msk [vmem:[#allocation11 + $0x10] sm:$0xff] %vm85, %v995
    %1000 = vst.msk [vmem:[#allocation11 + $0x18] sm:$0xff] %vm85, %v996
    // Predicated region
    $region38: #{tpu_custom_call.1} parent=1 // pred_check
      _
    $region39: #{tpu_custom_call.1} parent=1 // pred_check_branch
      %1002 = sbr.rel (0) target = $region41
    $region40: #{tpu_custom_call.1} parent=1 // pred_region
      %s1004 = ssub.s32 512, 512
      %1005 = vsyncadd [#allocation5], %s1004
      %s1006 = sshll.u32 [#allocation11], 4
      %s1007 = int_to_ptr.vmem [resolvable:$true] %s1006
      %1012 = dma.vmem_to_hbm [thread:$0]  %s1007, 512, %s5, [#allocation5], 128, 128, 8
    $region41: #{tpu_custom_call.1} parent=1 // pred_fallthru
      _
    // Predicated region
    $region42: #{tpu_custom_call.1} parent=1 // pred_check
      _
    $region43: #{tpu_custom_call.1} parent=1 // pred_check_branch
      %1014 = sbr.rel (0) target = $region45
    $region44: #{tpu_custom_call.1} parent=1 // pred_region
      %1015 = dma.done [#allocation5], 512
    $region45: #{tpu_custom_call.1} parent=1 // pred_fallthru
      _
    %1016 = vsyncpa [#allocation4], 1
    %1017 = vsyncpa [#allocation7], 1
    %1018 = vsyncpa [#allocation10], 1
    %1019 = vsyncpa [#allocation5], 1

</llo_original>
